<compile_context>
chip_gen: v5e
topology: v5e:2x2
jax: 0.10.0
libtpu: 0.0.40
codegen_flags: <defaults>
</compile_context>

<pallas_src>
import functools

import jax
import jax.numpy as jnp
from jax.experimental import pallas as pl
from jax.experimental.pallas import tpu as pltpu


def _mha_kernel(x_ref, wqkv_ref, bqkv_ref, wo_ref, bo_ref,
                hmask_ref, seg_ref, bmask_ref, o_ref, *, n_head, n_embd):
    E = n_embd
    x = x_ref[...]                                   # (N, E), N = Bblk * L rows

    # Fused Q/K/V projection (weights pre-transposed + concatenated to (E,3E);
    # Q columns already carry the 1/sqrt(head_dim) score scale).
    qkv = jnp.dot(x, wqkv_ref[...], preferred_element_type=jnp.float32) + bqkv_ref[...]
    q = qkv[:, :E]                                   # (N, E)
    k = qkv[:, E:2 * E]
    v = qkv[:, 2 * E:]

    # Head packing: packed row r = h*N + j holds key/value row j with every
    # feature outside head h zeroed.  Sublane-axis replication + one VPU
    # multiply -- no per-head loop, no lane slicing per head.
    hmask = hmask_ref[...]                                       # (H*N, E)
    k_packed = jnp.concatenate([k] * n_head, axis=0) * hmask     # (H*N, E)
    v_packed = jnp.concatenate([v] * n_head, axis=0) * hmask     # (H*N, E)

    # All-head, all-batch-in-block scores in one MXU call:
    #   s[i, h*N + j] = <Q_h[i, :], K_h[j, :]> / sqrt(head_dim)
    s = jax.lax.dot_general(q, k_packed,
                            dimension_numbers=(((1,), (1,)), ((), ())),
                            preferred_element_type=jnp.float32)  # (N, H*N)

    # Segmented softmax per (batch-in-block, head).  Subtracting the row-global
    # max is exact (shift invariance within each segment).  bmask zeroes the
    # cross-batch columns (all-ones when Bblk == 1); the per-segment sums are
    # produced and broadcast back by one matmul with a constant block-diagonal
    # ones matrix; (1 - bmask) keeps the reciprocal finite on the zeroed
    # cross-batch columns so 0 * recip stays exactly 0.
    bmask = bmask_ref[...]                                       # (N, H*N)
    s = s - jnp.max(s, axis=-1, keepdims=True)
    e = jnp.exp(s) * bmask
    denom = jnp.dot(e, seg_ref[...],
                    preferred_element_type=jnp.float32) + (1.0 - bmask)
    r = pl.reciprocal(denom, approx=True)            # EUP seed (free slot)
    r = r * (2.0 - denom * r)                        # one Newton step -> ~f32 accuracy
    p = e * r

    # attn[i, c] = sum_j P_{head(c)}[i, j] * V[j, c]  == heads concatenated.
    attn = jnp.dot(p, v_packed, preferred_element_type=jnp.float32)      # (N, E)

    # Output projection (weight pre-transposed in the wrapper).
    out = jnp.dot(attn, wo_ref[...], preferred_element_type=jnp.float32) + bo_ref[...]
    o_ref[...] = out.astype(o_ref.dtype)


def _choose_batch_block(batch, seq_len):
    """Rows-per-grid-step heuristic (review items 1 & 2).

    Targets ~128 projection rows per step (amortize ~600-cycle step overhead,
    fill MXU/VPU sublanes) but keeps the grid a multiple of 2 whenever the
    batch allows it, so a v7x megacore can shard the 'parallel' batch axis
    across its two TensorCores.
    """
    target_rows = 128
    b_blk = max(1, min(batch, target_rows // max(seq_len, 1)))
    while batch % b_blk:
        b_blk -= 1
    if batch // b_blk < 2 and batch % 2 == 0 and batch >= 2:
        b_blk = batch // 2
    # Block sublane extent must be a multiple of 8 unless it spans the array.
    if batch // b_blk > 1 and (b_blk * seq_len) % 8 != 0:
        b_blk = batch
    return b_blk


def self_attention(x, params, n_head):
    """x: (B, L, E); params = (in_proj_w (3E,E), in_proj_b (3E,), out_w (E,E), out_b (E,))."""
    w_in, b_in, w_out, b_out = params
    B, L, E = x.shape
    assert E % n_head == 0, "n_embd must be divisible by n_head"
    hd = E // n_head
    scale = 1.0 / float(hd) ** 0.5

    b_blk = _choose_batch_block(B, L)
    n_steps = B // b_blk
    N = b_blk * L                                   # rows per grid step
    HN = n_head * N                                 # packed K/V rows per step

    # --- wrapper-side preprocessing (runs once, outside the kernel) ---------
    wq, wk, wv = w_in[:E], w_in[E:2 * E], w_in[2 * E:]
    bq, bk, bv = b_in[:E], b_in[E:2 * E], b_in[2 * E:]
    wqkv_t = jnp.concatenate([(scale * wq).T, wk.T, wv.T], axis=1)   # (E, 3E)
    bqkv = jnp.concatenate([scale * bq, bk, bv]).reshape(1, 3 * E)   # (1, 3E)
    wo_t = w_out.T                                                   # (E, E)
    bo2 = b_out.reshape(1, E)

    # Constant packing masks, hoisted out of the kernel:
    #   hmask[r, c] = 1 iff feature c belongs to head(r)            (HN, E)
    #   seg[r, r']  = 1 iff rows r, r' share (head, batch-in-block) (HN, HN)
    #   bmask[i, r] = 1 iff query row i and packed row r share the batch (N, HN)
    row_head = jnp.arange(HN, dtype=jnp.int32) // N
    row_batch = (jnp.arange(HN, dtype=jnp.int32) % N) // L
    col_head = jnp.arange(E, dtype=jnp.int32) // hd
    q_batch = jnp.arange(N, dtype=jnp.int32) // L
    hmask = (row_head[:, None] == col_head[None, :]).astype(x.dtype)
    seg = ((row_head[:, None] == row_head[None, :]) &
           (row_batch[:, None] == row_batch[None, :])).astype(x.dtype)
    bmask = (q_batch[:, None] == row_batch[None, :]).astype(x.dtype)

    # Flatten batch into the sublane axis outside the kernel (free in XLA),
    # so the kernel never reshapes.
    x2 = x.reshape(B * L, E)

    # Constant blocks: same block every grid step -> DMA'd once and reused.
    # NOTE: the pipeline default is DOUBLE-buffering; at production E set
    # pipeline_mode=pl.Buffered(1) on these specs to halve their VMEM use.
    const2d = lambda a: pl.BlockSpec(a.shape, lambda s: (0, 0))

    out2 = pl.pallas_call(
        functools.partial(_mha_kernel, n_head=n_head, n_embd=E),
        out_shape=jax.ShapeDtypeStruct((B * L, E), x.dtype),
        grid_spec=pltpu.PrefetchScalarGridSpec(
            num_scalar_prefetch=0,
            grid=(n_steps,),
            in_specs=[
                pl.BlockSpec((N, E), lambda s: (s, 0)),   # x rows for this batch block
                const2d(wqkv_t), const2d(bqkv),
                const2d(wo_t), const2d(bo2),
                const2d(hmask), const2d(seg), const2d(bmask),
            ],
            out_specs=pl.BlockSpec((N, E), lambda s: (s, 0)),
        ),
        compiler_params=pltpu.CompilerParams(
            dimension_semantics=("parallel",)),    # batch blocks across v7x's 2 TCs
    )(x2, wqkv_t, bqkv, wo_t, bo2, hmask, seg, bmask)

    return out2.reshape(B, L, E)


def reference(x, params, n_head):
    """Plain-JAX mirror of nn.MultiheadAttention self-attention (eval, no mask)."""
    w_in, b_in, w_out, b_out = params
    B, L, E = x.shape
    hd = E // n_head
    qkv = x @ w_in.T + b_in                                     # (B, L, 3E)
    q, k, v = jnp.split(qkv, 3, axis=-1)
    q = q.reshape(B, L, n_head, hd).transpose(0, 2, 1, 3)
    k = k.reshape(B, L, n_head, hd).transpose(0, 2, 1, 3)
    v = v.reshape(B, L, n_head, hd).transpose(0, 2, 1, 3)
    s = jnp.einsum("bhqd,bhkd->bhqk", q, k) / jnp.sqrt(jnp.float32(hd))
    p = jax.nn.softmax(s, axis=-1)
    o = jnp.einsum("bhqk,bhkd->bhqd", p, v)
    o = o.transpose(0, 2, 1, 3).reshape(B, L, E)
    return o @ w_out.T + b_out


if __name__ == "__main__":
    # Small shapes consistent with the module: n_embd=32, n_head=4, seq=8, batch=2.
    B, L, E, H = 2, 8, 32, 4

    key = jax.random.PRNGKey(0)
    ks = jax.random.split(key, 5)
    wscale = 0.1
    x = jax.random.normal(ks[0], (B, L, E), jnp.float32)

    # Synthetic nn.MultiheadAttention parameters (in_proj + out_proj).
    w_in = wscale * jax.random.normal(ks[1], (3 * E, E), jnp.float32)
    b_in = wscale * jax.random.normal(ks[2], (3 * E,), jnp.float32)
    w_out = wscale * jax.random.normal(ks[3], (E, E), jnp.float32)
    b_out = wscale * jax.random.normal(ks[4], (E,), jnp.float32)
    params = (w_in, b_in, w_out, b_out)

    out = self_attention(x, params, H)
    out = jax.block_until_ready(out)

    ref = reference(x, params, H)
    assert out.shape == (B, L, E)
    assert jnp.allclose(out, ref, atol=1e-4, rtol=1e-4), "mismatch vs reference"

    print("KERNEL_OK")
</pallas_src>

<mosaic_0001>
module attributes {stable_mosaic.version = 11 : i64} {
  func.func @_mha_kernel(%arg0: i32, %arg1: memref<8x32xf32, #tpu.memory_space<vmem>>, %arg2: memref<32x96xf32, #tpu.memory_space<vmem>>, %arg3: memref<1x96xf32, #tpu.memory_space<vmem>>, %arg4: memref<32x32xf32, #tpu.memory_space<vmem>>, %arg5: memref<1x32xf32, #tpu.memory_space<vmem>>, %arg6: memref<32x32xf32, #tpu.memory_space<vmem>>, %arg7: memref<32x32xf32, #tpu.memory_space<vmem>>, %arg8: memref<8x32xf32, #tpu.memory_space<vmem>>, %arg9: memref<8x32xf32, #tpu.memory_space<vmem>>) attributes {dimension_semantics = [#tpu.dimension_semantics<parallel>], iteration_bounds = array<i64: 2>, scalar_prefetch = 0 : i64, scratch_operands = 0 : i64, tpu.core_type = #tpu.core_type<tc>, window_params = [{transform_indices = @transform_0, window_bounds = array<i64: 8, 32>}, {pipeline_mode = #tpu.pipeline_mode<synchronous>, transform_indices = @transform_1, window_bounds = array<i64: 32, 96>}, {pipeline_mode = #tpu.pipeline_mode<synchronous>, transform_indices = @transform_2, window_bounds = array<i64: 1, 96>}, {pipeline_mode = #tpu.pipeline_mode<synchronous>, transform_indices = @transform_3, window_bounds = array<i64: 32, 32>}, {pipeline_mode = #tpu.pipeline_mode<synchronous>, transform_indices = @transform_4, window_bounds = array<i64: 1, 32>}, {pipeline_mode = #tpu.pipeline_mode<synchronous>, transform_indices = @transform_5, window_bounds = array<i64: 32, 32>}, {pipeline_mode = #tpu.pipeline_mode<synchronous>, transform_indices = @transform_6, window_bounds = array<i64: 32, 32>}, {pipeline_mode = #tpu.pipeline_mode<synchronous>, transform_indices = @transform_7, window_bounds = array<i64: 8, 32>}, {transform_indices = @transform_8, window_bounds = array<i64: 8, 32>}]} {
    %c0 = arith.constant 0 : index
    %c0_0 = arith.constant 0 : index
    %0 = vector.load %arg1[%c0, %c0_0] : memref<8x32xf32, #tpu.memory_space<vmem>>, vector<8x32xf32>
    %c0_1 = arith.constant 0 : index
    %c0_2 = arith.constant 0 : index
    %1 = vector.load %arg2[%c0_1, %c0_2] : memref<32x96xf32, #tpu.memory_space<vmem>>, vector<32x96xf32>
    %cst = arith.constant dense<0.000000e+00> : vector<8x96xf32>
    %2 = tpu.matmul %0, %1, %cst {dimension_numbers = #tpu.dot_dimension_numbers<[1], [0], [0], [1], [0, 0, 1, 1], [], []>} : vector<8x32xf32>, vector<32x96xf32>, vector<8x96xf32> -> vector<8x96xf32>
    %c0_3 = arith.constant 0 : index
    %c0_4 = arith.constant 0 : index
    %3 = vector.load %arg3[%c0_3, %c0_4] : memref<1x96xf32, #tpu.memory_space<vmem>>, vector<1x96xf32>
    %4 = vector.broadcast %3 : vector<1x96xf32> to vector<8x96xf32>
    %5 = arith.addf %2, %4 : vector<8x96xf32>
    %6 = vector.extract_strided_slice %5 {offsets = [0, 0], sizes = [8, 32], strides = [1, 1]} : vector<8x96xf32> to vector<8x32xf32>
    %7 = vector.extract_strided_slice %5 {offsets = [0, 32], sizes = [8, 32], strides = [1, 1]} : vector<8x96xf32> to vector<8x32xf32>
    %8 = vector.extract_strided_slice %5 {offsets = [0, 64], sizes = [8, 32], strides = [1, 1]} : vector<8x96xf32> to vector<8x32xf32>
    %c0_5 = arith.constant 0 : index
    %c0_6 = arith.constant 0 : index
    %9 = vector.load %arg6[%c0_5, %c0_6] : memref<32x32xf32, #tpu.memory_space<vmem>>, vector<32x32xf32>
    %10 = tpu.concatenate %7, %7, %7, %7 in 0 : vector<8x32xf32>, vector<8x32xf32>, vector<8x32xf32>, vector<8x32xf32> -> vector<32x32xf32>
    %11 = arith.mulf %10, %9 : vector<32x32xf32>
    %12 = tpu.concatenate %8, %8, %8, %8 in 0 : vector<8x32xf32>, vector<8x32xf32>, vector<8x32xf32>, vector<8x32xf32> -> vector<32x32xf32>
    %13 = arith.mulf %12, %9 : vector<32x32xf32>
    %cst_7 = arith.constant dense<0.000000e+00> : vector<8x32xf32>
    %14 = tpu.matmul %6, %11, %cst_7 {dimension_numbers = #tpu.dot_dimension_numbers<[1], [1], [0], [0], [0, 0, 1, 0], [], []>} : vector<8x32xf32>, vector<32x32xf32>, vector<8x32xf32> -> vector<8x32xf32>
    %c0_8 = arith.constant 0 : index
    %c0_9 = arith.constant 0 : index
    %15 = vector.load %arg8[%c0_8, %c0_9] : memref<8x32xf32, #tpu.memory_space<vmem>>, vector<8x32xf32>
    %cst_10 = arith.constant dense<0xFF800000> : vector<8xf32>
    %16 = vector.multi_reduction <maximumf>, %14, %cst_10 [1] : vector<8x32xf32> to vector<8xf32>
    %17 = vector.shape_cast %16 : vector<8xf32> to vector<8x1xf32>
    %18 = vector.broadcast %17 : vector<8x1xf32> to vector<8x32xf32>
    %19 = arith.subf %14, %18 : vector<8x32xf32>
    %20 = math.exp %19 : vector<8x32xf32>
    %21 = arith.mulf %20, %15 : vector<8x32xf32>
    %c0_11 = arith.constant 0 : index
    %c0_12 = arith.constant 0 : index
    %22 = vector.load %arg7[%c0_11, %c0_12] : memref<32x32xf32, #tpu.memory_space<vmem>>, vector<32x32xf32>
    %cst_13 = arith.constant dense<0.000000e+00> : vector<8x32xf32>
    %23 = tpu.matmul %21, %22, %cst_13 {dimension_numbers = #tpu.dot_dimension_numbers<[1], [0], [0], [1], [0, 0, 1, 1], [], []>} : vector<8x32xf32>, vector<32x32xf32>, vector<8x32xf32> -> vector<8x32xf32>
    %cst_14 = arith.constant 1.000000e+00 : f32
    %24 = vector.broadcast %cst_14 : f32 to vector<8x32xf32>
    %25 = arith.subf %24, %15 : vector<8x32xf32>
    %26 = arith.addf %23, %25 : vector<8x32xf32>
    %27 = tpu.reciprocal %26 {approx = true} : vector<8x32xf32> -> vector<8x32xf32>
    %28 = arith.mulf %26, %27 : vector<8x32xf32>
    %cst_15 = arith.constant 2.000000e+00 : f32
    %29 = vector.broadcast %cst_15 : f32 to vector<8x32xf32>
    %30 = arith.subf %29, %28 : vector<8x32xf32>
    %31 = arith.mulf %27, %30 : vector<8x32xf32>
    %32 = arith.mulf %21, %31 : vector<8x32xf32>
    %cst_16 = arith.constant dense<0.000000e+00> : vector<8x32xf32>
    %33 = tpu.matmul %32, %13, %cst_16 {dimension_numbers = #tpu.dot_dimension_numbers<[1], [0], [0], [1], [0, 0, 1, 1], [], []>} : vector<8x32xf32>, vector<32x32xf32>, vector<8x32xf32> -> vector<8x32xf32>
    %c0_17 = arith.constant 0 : index
    %c0_18 = arith.constant 0 : index
    %34 = vector.load %arg4[%c0_17, %c0_18] : memref<32x32xf32, #tpu.memory_space<vmem>>, vector<32x32xf32>
    %cst_19 = arith.constant dense<0.000000e+00> : vector<8x32xf32>
    %35 = tpu.matmul %33, %34, %cst_19 {dimension_numbers = #tpu.dot_dimension_numbers<[1], [0], [0], [1], [0, 0, 1, 1], [], []>} : vector<8x32xf32>, vector<32x32xf32>, vector<8x32xf32> -> vector<8x32xf32>
    %c0_20 = arith.constant 0 : index
    %c0_21 = arith.constant 0 : index
    %36 = vector.load %arg5[%c0_20, %c0_21] : memref<1x32xf32, #tpu.memory_space<vmem>>, vector<1x32xf32>
    %37 = vector.broadcast %36 : vector<1x32xf32> to vector<8x32xf32>
    %38 = arith.addf %35, %37 : vector<8x32xf32>
    %c0_22 = arith.constant 0 : index
    %c0_23 = arith.constant 0 : index
    %39 = vector.load %arg9[%c0_22, %c0_23] : memref<8x32xf32, #tpu.memory_space<vmem>>, vector<8x32xf32>
    tpu.vector_store %arg9[%c0_22, %c0_23], %38 {strides = array<i32>} : memref<8x32xf32, #tpu.memory_space<vmem>>, vector<8x32xf32>,
    return
  }
  func.func @transform_0(%arg0: i32) -> (i32, i32) {
    %c0_i32 = arith.constant 0 : i32
    %c0_i32_0 = arith.constant 0 : i32
    return %arg0, %c0_i32 : i32, i32
  }
  func.func @transform_1(%arg0: i32) -> (i32, i32) {
    %c0_i32 = arith.constant 0 : i32
    %c0_i32_0 = arith.constant 0 : i32
    %c0_i32_1 = arith.constant 0 : i32
    return %c0_i32, %c0_i32_0 : i32, i32
  }
  func.func @transform_2(%arg0: i32) -> (i32, i32) {
    %c0_i32 = arith.constant 0 : i32
    %c0_i32_0 = arith.constant 0 : i32
    %c0_i32_1 = arith.constant 0 : i32
    return %c0_i32, %c0_i32_0 : i32, i32
  }
  func.func @transform_3(%arg0: i32) -> (i32, i32) {
    %c0_i32 = arith.constant 0 : i32
    %c0_i32_0 = arith.constant 0 : i32
    %c0_i32_1 = arith.constant 0 : i32
    return %c0_i32, %c0_i32_0 : i32, i32
  }
  func.func @transform_4(%arg0: i32) -> (i32, i32) {
    %c0_i32 = arith.constant 0 : i32
    %c0_i32_0 = arith.constant 0 : i32
    %c0_i32_1 = arith.constant 0 : i32
    return %c0_i32, %c0_i32_0 : i32, i32
  }
  func.func @transform_5(%arg0: i32) -> (i32, i32) {
    %c0_i32 = arith.constant 0 : i32
    %c0_i32_0 = arith.constant 0 : i32
    %c0_i32_1 = arith.constant 0 : i32
    return %c0_i32, %c0_i32_0 : i32, i32
  }
  func.func @transform_6(%arg0: i32) -> (i32, i32) {
    %c0_i32 = arith.constant 0 : i32
    %c0_i32_0 = arith.constant 0 : i32
    %c0_i32_1 = arith.constant 0 : i32
    return %c0_i32, %c0_i32_0 : i32, i32
  }
  func.func @transform_7(%arg0: i32) -> (i32, i32) {
    %c0_i32 = arith.constant 0 : i32
    %c0_i32_0 = arith.constant 0 : i32
    %c0_i32_1 = arith.constant 0 : i32
    return %c0_i32, %c0_i32_0 : i32, i32
  }
  func.func @transform_8(%arg0: i32) -> (i32, i32) {
    %c0_i32 = arith.constant 0 : i32
    %c0_i32_0 = arith.constant 0 : i32
    return %arg0, %c0_i32 : i32, i32
  }
}

</mosaic_0001>

<llo_original>
// kernel: tpu_custom_call.1
$region0: #{tpu_custom_call.1}
  #allocation0 [shape = 'u32[]', space=smem, size = 0x4, offset = 0x4, fixed_abs, tag = 'smem constant byte address 0x4 - core index']
  #allocation1 [shape = 'u32[72,128]{1,0:T(1,128)}', space=vmem, size = 0x9000, scoped, tag = 'internal scratch']
  %s0 = inlined_call_operand.hbm [shape: f32[16,32], index: 0, kind: input, shape index: {}]
  %s1 = inlined_call_operand.hbm [shape: f32[32,96], index: 1, kind: input, shape index: {}]
  %s2 = inlined_call_operand.vmem [shape: f32[1,96], index: 2, kind: input, shape index: {}]
  %s3 = inlined_call_operand.hbm [shape: f32[32,32], index: 3, kind: input, shape index: {}]
  %s4 = inlined_call_operand.vmem [shape: f32[1,32], index: 4, kind: input, shape index: {}]
  %s5 = inlined_call_operand.hbm [shape: f32[32,32], index: 5, kind: input, shape index: {}]
  %s6 = inlined_call_operand.hbm [shape: f32[32,32], index: 6, kind: input, shape index: {}]
  %s7 = inlined_call_operand.hbm [shape: f32[8,32], index: 7, kind: input, shape index: {}]
  %s8 = inlined_call_operand.hbm [shape: f32[16,32], index: 8, kind: output, shape index: {}]
  %s9 = sld [smem:[#allocation0]]
  $region89: #{tpu_custom_call.1} parent=0
    _
  %s11 = ssub.s32 1, %s9
  %s12 = scalar_select 0, %s11, %s9
  $region1: #{tpu_custom_call.1} parent=0
    #allocation2 [shape = 'u8[8192]{0}', space=vmem, size = 0x2000, scoped, tag = 'input window, operand 0']
    #allocation3 [shape = 's32[2]{0}', space=sflag, size = 0x8, scoped, tag = 'scoped memory for tpu_custom_call.1']
    #allocation4 [shape = 's32[2]{0}', space=sflag, size = 0x8, scoped, tag = 'scoped memory for tpu_custom_call.1']
    #allocation5 [shape = 'u8[16384]{0}', space=vmem, size = 0x4000, scoped, tag = 'input window, operand 1, single buffered']
    #allocation6 [shape = 's32[1]{0}', space=sflag, size = 0x4, scoped, tag = 'scoped memory for tpu_custom_call.1']
    #allocation7 [shape = 'u8[16384]{0}', space=vmem, size = 0x4000, scoped, tag = 'input window, operand 3, single buffered']
    #allocation8 [shape = 'u8[16384]{0}', space=vmem, size = 0x4000, scoped, tag = 'input window, operand 5, single buffered']
    #allocation9 [shape = 's32[1]{0}', space=sflag, size = 0x4, scoped, tag = 'scoped memory for tpu_custom_call.1']
    #allocation10 [shape = 'u8[16384]{0}', space=vmem, size = 0x4000, scoped, tag = 'input window, operand 6, single buffered']
    #allocation11 [shape = 'u8[4096]{0}', space=vmem, size = 0x1000, scoped, tag = 'input window, operand 7, single buffered']
    #allocation12 [shape = 's32[1]{0}', space=sflag, size = 0x4, scoped, tag = 'scoped memory for tpu_custom_call.1']
    #allocation13 [shape = 'u8[8192]{0}', space=vmem, size = 0x2000, scoped, tag = 'output window, operand 0']
    %13 = vsyncpa [#allocation3], 0
    %s14 = scalar_lea.sflag [#allocation3], 1
    %15 = vsyncpa %s14, 0
    %16 = vsyncpa [#allocation6], 0
    %17 = vsyncpa [#allocation9], 0
    %18 = vsyncpa [#allocation12], 0
    %19 = vsyncpa [#allocation4], 0
    %s20 = scalar_lea.sflag [#allocation4], 1
    %21 = vsyncpa %s20, 0
    loop: start=0, step=1, limit=4
    $region2: #{tpu_custom_call.1} parent=1 // loop_pre_header
      _
    $region3: #{tpu_custom_call.1} parent=1 // loop_header
      %s23 = sphi 0, %s27
      %p24 = scmp.ge.s32.totalorder %s23, 4
      %s33 = sphi 0, %s35
      %s36 = sphi 0, %s33
      %s37 = sphi 0, %s36
      %s53 = sphi 0, %s37
      %s57 = sphi 0, %s57
      %s59 = sphi 0, %s57
      %s60 = sphi 0, %s59
      %s74 = sphi 0, %s60
      %s78 = sphi 0, %s78
      %s80 = sphi 0, %s78
      %s81 = sphi 0, %s80
      %s95 = sphi 0, %s81
      %s99 = sphi 0, %s99
      %s101 = sphi 0, %s99
      %s102 = sphi 0, %s101
      %s116 = sphi 0, %s102
      %s120 = sphi 0, %s120
      %s122 = sphi 0, %s120
      %s123 = sphi 0, %s122
      %s137 = sphi 0, %s123
      %s141 = sphi 0, %s141
      %s143 = sphi 0, %s141
      %s144 = sphi 0, %s143
      %s158 = sphi 0, %s144
      %s162 = sphi 0, %s162
      %s164 = sphi 0, %s162
      %s165 = sphi 0, %s164
      %s179 = sphi 0, %s165
      %s183 = sphi 0, %s183
      %s185 = sphi 0, %s183
      %s186 = sphi 0, %s185
      %s200 = sphi 0, %s186
      %s206 = sphi 0, %s208
      %s209 = sphi 0, %s206
      %s210 = sphi 0, %s209
      %s226 = sphi 0, %s210
    $region4: #{tpu_custom_call.1} parent=1 // loop_header_branch
      %26 = sbr.rel (%p24) target = $region8
    $region5: #{tpu_custom_call.1} parent=1 // loop_body
      %s28 = ssub.s32 %s23, 1
      %s29 = ssub.s32 %s23, 2
      %s30 = sadd.s32 %s23, 1
      %s31 = ssub.s32 %s23, %s30
      %p32 = scmp.eq.s32.totalorder %s31, 0
      %s34 = sadd.s32 %s33, 1
      %s35 = scalar_select %p32, %s33, %s34
      %p38 = pneg %p32
      %p39 = scmp.eq.s32.totalorder %s23, 1
      %p40 = por %p38, %p39
      %p41 = scmp.ne.s32.totalorder %s33, %s36
      %p42 = scmp.eq.s32.totalorder %s23, 0
      %p43 = por %p41, %p42
      %p44 = scmp.ne.s32.totalorder %s33, %s36
      %p45 = scmp.eq.s32.totalorder %s28, 1
      %p46 = por %p44, %p45
      %p47 = scmp.ne.s32.totalorder %s36, %s37
      %p48 = scmp.eq.s32.totalorder %s28, 0
      %p49 = por %p47, %p48
      %p50 = scmp.ne.s32.totalorder %s36, %s37
      %p51 = scmp.eq.s32.totalorder %s29, 1
      %p52 = por %p50, %p51
      %p54 = scmp.ne.s32.totalorder %s37, %s53
      %p55 = scmp.eq.s32.totalorder %s29, 0
      %p56 = por %p54, %p55
      %s58 = sadd.s32 %s57, 1
      %p61 = scmp.eq.s32.totalorder %s23, 1
      %p62 = scmp.ne.s32.totalorder %s57, %s59
      %p63 = scmp.eq.s32.totalorder %s23, 0
      %p64 = por %p62, %p63
      %p65 = scmp.ne.s32.totalorder %s57, %s59
      %p66 = scmp.eq.s32.totalorder %s28, 1
      %p67 = por %p65, %p66
      %p68 = scmp.ne.s32.totalorder %s59, %s60
      %p69 = scmp.eq.s32.totalorder %s28, 0
      %p70 = por %p68, %p69
      %p71 = scmp.ne.s32.totalorder %s59, %s60
      %p72 = scmp.eq.s32.totalorder %s29, 1
      %p73 = por %p71, %p72
      %p75 = scmp.ne.s32.totalorder %s60, %s74
      %p76 = scmp.eq.s32.totalorder %s29, 0
      %p77 = por %p75, %p76
      %s79 = sadd.s32 %s78, 1
      %p82 = scmp.eq.s32.totalorder %s23, 1
      %p83 = scmp.ne.s32.totalorder %s78, %s80
      %p84 = scmp.eq.s32.totalorder %s23, 0
      %p85 = por %p83, %p84
      %p86 = scmp.ne.s32.totalorder %s78, %s80
      %p87 = scmp.eq.s32.totalorder %s28, 1
      %p88 = por %p86, %p87
      %p89 = scmp.ne.s32.totalorder %s80, %s81
      %p90 = scmp.eq.s32.totalorder %s28, 0
      %p91 = por %p89, %p90
      %p92 = scmp.ne.s32.totalorder %s80, %s81
      %p93 = scmp.eq.s32.totalorder %s29, 1
      %p94 = por %p92, %p93
      %p96 = scmp.ne.s32.totalorder %s81, %s95
      %p97 = scmp.eq.s32.totalorder %s29, 0
      %p98 = por %p96, %p97
      %s100 = sadd.s32 %s99, 1
      %p103 = scmp.eq.s32.totalorder %s23, 1
      %p104 = scmp.ne.s32.totalorder %s99, %s101
      %p105 = scmp.eq.s32.totalorder %s23, 0
      %p106 = por %p104, %p105
      %p107 = scmp.ne.s32.totalorder %s99, %s101
      %p108 = scmp.eq.s32.totalorder %s28, 1
      %p109 = por %p107, %p108
      %p110 = scmp.ne.s32.totalorder %s101, %s102
      %p111 = scmp.eq.s32.totalorder %s28, 0
      %p112 = por %p110, %p111
      %p113 = scmp.ne.s32.totalorder %s101, %s102
      %p114 = scmp.eq.s32.totalorder %s29, 1
      %p115 = por %p113, %p114
      %p117 = scmp.ne.s32.totalorder %s102, %s116
      %p118 = scmp.eq.s32.totalorder %s29, 0
      %p119 = por %p117, %p118
      %s121 = sadd.s32 %s120, 1
      %p124 = scmp.eq.s32.totalorder %s23, 1
      %p125 = scmp.ne.s32.totalorder %s120, %s122
      %p126 = scmp.eq.s32.totalorder %s23, 0
      %p127 = por %p125, %p126
      %p128 = scmp.ne.s32.totalorder %s120, %s122
      %p129 = scmp.eq.s32.totalorder %s28, 1
      %p130 = por %p128, %p129
      %p131 = scmp.ne.s32.totalorder %s122, %s123
      %p132 = scmp.eq.s32.totalorder %s28, 0
      %p133 = por %p131, %p132
      %p134 = scmp.ne.s32.totalorder %s122, %s123
      %p135 = scmp.eq.s32.totalorder %s29, 1
      %p136 = por %p134, %p135
      %p138 = scmp.ne.s32.totalorder %s123, %s137
      %p139 = scmp.eq.s32.totalorder %s29, 0
      %p140 = por %p138, %p139
      %s142 = sadd.s32 %s141, 1
      %p145 = scmp.eq.s32.totalorder %s23, 1
      %p146 = scmp.ne.s32.totalorder %s141, %s143
      %p147 = scmp.eq.s32.totalorder %s23, 0
      %p148 = por %p146, %p147
      %p149 = scmp.ne.s32.totalorder %s141, %s143
      %p150 = scmp.eq.s32.totalorder %s28, 1
      %p151 = por %p149, %p150
      %p152 = scmp.ne.s32.totalorder %s143, %s144
      %p153 = scmp.eq.s32.totalorder %s28, 0
      %p154 = por %p152, %p153
      %p155 = scmp.ne.s32.totalorder %s143, %s144
      %p156 = scmp.eq.s32.totalorder %s29, 1
      %p157 = por %p155, %p156
      %p159 = scmp.ne.s32.totalorder %s144, %s158
      %p160 = scmp.eq.s32.totalorder %s29, 0
      %p161 = por %p159, %p160
      %s163 = sadd.s32 %s162, 1
      %p166 = scmp.eq.s32.totalorder %s23, 1
      %p167 = scmp.ne.s32.totalorder %s162, %s164
      %p168 = scmp.eq.s32.totalorder %s23, 0
      %p169 = por %p167, %p168
      %p170 = scmp.ne.s32.totalorder %s162, %s164
      %p171 = scmp.eq.s32.totalorder %s28, 1
      %p172 = por %p170, %p171
      %p173 = scmp.ne.s32.totalorder %s164, %s165
      %p174 = scmp.eq.s32.totalorder %s28, 0
      %p175 = por %p173, %p174
      %p176 = scmp.ne.s32.totalorder %s164, %s165
      %p177 = scmp.eq.s32.totalorder %s29, 1
      %p178 = por %p176, %p177
      %p180 = scmp.ne.s32.totalorder %s165, %s179
      %p181 = scmp.eq.s32.totalorder %s29, 0
      %p182 = por %p180, %p181
      %s184 = sadd.s32 %s183, 1
      %p187 = scmp.eq.s32.totalorder %s23, 1
      %p188 = scmp.ne.s32.totalorder %s183, %s185
      %p189 = scmp.eq.s32.totalorder %s23, 0
      %p190 = por %p188, %p189
      %p191 = scmp.ne.s32.totalorder %s183, %s185
      %p192 = scmp.eq.s32.totalorder %s28, 1
      %p193 = por %p191, %p192
      %p194 = scmp.ne.s32.totalorder %s185, %s186
      %p195 = scmp.eq.s32.totalorder %s28, 0
      %p196 = por %p194, %p195
      %p197 = scmp.ne.s32.totalorder %s185, %s186
      %p198 = scmp.eq.s32.totalorder %s29, 1
      %p199 = por %p197, %p198
      %p201 = scmp.ne.s32.totalorder %s186, %s200
      %p202 = scmp.eq.s32.totalorder %s29, 0
      %p203 = por %p201, %p202
      %s204 = ssub.s32 %s23, %s30
      %p205 = scmp.eq.s32.totalorder %s204, 0
      %s207 = sadd.s32 %s206, 1
      %s208 = scalar_select %p205, %s206, %s207
      %p211 = pneg %p205
      %p212 = scmp.eq.s32.totalorder %s23, 1
      %p213 = por %p211, %p212
      %p214 = scmp.ne.s32.totalorder %s206, %s209
      %p215 = scmp.eq.s32.totalorder %s23, 0
      %p216 = por %p214, %p215
      %p217 = scmp.ne.s32.totalorder %s206, %s209
      %p218 = scmp.eq.s32.totalorder %s28, 1
      %p219 = por %p217, %p218
      %p220 = scmp.ne.s32.totalorder %s209, %s210
      %p221 = scmp.eq.s32.totalorder %s28, 0
      %p222 = por %p220, %p221
      %p223 = scmp.ne.s32.totalorder %s209, %s210
      %p224 = scmp.eq.s32.totalorder %s29, 1
      %p225 = por %p223, %p224
      %p227 = scmp.ne.s32.totalorder %s210, %s226
      %p228 = scmp.eq.s32.totalorder %s29, 0
      %p229 = por %p227, %p228
      %p230 = scmp.le.s32.totalorder 1, %s23
      %p231 = scmp.lt.s32.totalorder %s23, 3
      %p232 = pnand %p230, %p231
      %p233 = pneg %p232
      // Predicated region
      $region9: #{tpu_custom_call.1} parent=5 // pred_check
        _
      $region10: #{tpu_custom_call.1} parent=5 // pred_check_branch
        %235 = sbr.rel (%p232) target = $region12
      $region11: #{tpu_custom_call.1} parent=5 // pred_region
        %s236 = ssub.s32 %s23, 1
        // Predicated region
        $region13: #{tpu_custom_call.1} parent=11 // pred_check
          %p237 = pneg %p70
        $region14: #{tpu_custom_call.1} parent=11 // pred_check_branch
          %239 = sbr.rel (%p237) target = $region16
        $region15: #{tpu_custom_call.1} parent=11 // pred_region
          %241 = vsyncadd [#allocation6], 0
          %s242 = sshll.u32 %s1, 4
          %s243 = int_to_ptr.hbm [resolvable:$true] %s242
          %s244 = sshll.u32 [#allocation5], 4
          %s245 = int_to_ptr.vmem [resolvable:$true] %s244
          %250 = dma.hbm_to_vmem [thread:$0]  %s243, 512, %s245, [#allocation6], 128, 128, 8
        $region16: #{tpu_custom_call.1} parent=11 // pred_fallthru
          _
        // Predicated region
        $region17: #{tpu_custom_call.1} parent=11 // pred_check
          %p251 = pneg %p91
        $region18: #{tpu_custom_call.1} parent=11 // pred_check_branch
          %253 = sbr.rel (%p251) target = $region20
        $region19: #{tpu_custom_call.1} parent=11 // pred_region
          _
        $region20: #{tpu_custom_call.1} parent=11 // pred_fallthru
          _
        // Predicated region
        $region21: #{tpu_custom_call.1} parent=11 // pred_check
          %p254 = pneg %p112
        $region22: #{tpu_custom_call.1} parent=11 // pred_check_branch
          %256 = sbr.rel (%p254) target = $region24
        $region23: #{tpu_custom_call.1} parent=11 // pred_region
          %258 = vsyncadd [#allocation6], 0
          %s259 = sshll.u32 %s3, 4
          %s260 = int_to_ptr.hbm [resolvable:$true] %s259
          %s261 = sshll.u32 [#allocation7], 4
          %s262 = int_to_ptr.vmem [resolvable:$true] %s261
          %267 = dma.hbm_to_vmem [thread:$0]  %s260, 512, %s262, [#allocation6], 128, 128, 8
        $region24: #{tpu_custom_call.1} parent=11 // pred_fallthru
          _
        // Predicated region
        $region25: #{tpu_custom_call.1} parent=11 // pred_check
          %p268 = pneg %p133
        $region26: #{tpu_custom_call.1} parent=11 // pred_check_branch
          %270 = sbr.rel (%p268) target = $region28
        $region27: #{tpu_custom_call.1} parent=11 // pred_region
          _
        $region28: #{tpu_custom_call.1} parent=11 // pred_fallthru
          _
        // Predicated region
        $region29: #{tpu_custom_call.1} parent=11 // pred_check
          %p271 = pneg %p154
        $region30: #{tpu_custom_call.1} parent=11 // pred_check_branch
          %273 = sbr.rel (%p271) target = $region32
        $region31: #{tpu_custom_call.1} parent=11 // pred_region
          %275 = vsyncadd [#allocation9], 0
          %s276 = sshll.u32 %s5, 4
          %s277 = int_to_ptr.hbm [resolvable:$true] %s276
          %s278 = sshll.u32 [#allocation8], 4
          %s279 = int_to_ptr.vmem [resolvable:$true] %s278
          %284 = dma.hbm_to_vmem [thread:$0]  %s277, 512, %s279, [#allocation9], 128, 128, 8
        $region32: #{tpu_custom_call.1} parent=11 // pred_fallthru
          _
        // Predicated region
        $region33: #{tpu_custom_call.1} parent=11 // pred_check
          %p285 = pneg %p175
        $region34: #{tpu_custom_call.1} parent=11 // pred_check_branch
          %287 = sbr.rel (%p285) target = $region36
        $region35: #{tpu_custom_call.1} parent=11 // pred_region
          %289 = vsyncadd [#allocation9], 0
          %s290 = sshll.u32 %s6, 4
          %s291 = int_to_ptr.hbm [resolvable:$true] %s290
          %s292 = sshll.u32 [#allocation10], 4
          %s293 = int_to_ptr.vmem [resolvable:$true] %s292
          %298 = dma.hbm_to_vmem [thread:$0]  %s291, 512, %s293, [#allocation9], 128, 128, 8
        $region36: #{tpu_custom_call.1} parent=11 // pred_fallthru
          _
        // Predicated region
        $region37: #{tpu_custom_call.1} parent=11 // pred_check
          %p299 = pneg %p196
        $region38: #{tpu_custom_call.1} parent=11 // pred_check_branch
          %301 = sbr.rel (%p299) target = $region40
        $region39: #{tpu_custom_call.1} parent=11 // pred_region
          %303 = vsyncadd [#allocation12], 0
          %s305 = sshll.u32 %s7, 4
          %s306 = int_to_ptr.hbm [resolvable:$true] %s305
          %s307 = sshll.u32 [#allocation11], 4
          %s308 = int_to_ptr.vmem [resolvable:$true] %s307
          %310 = dma.hbm_to_vmem [thread:$0]  %s306, 128, %s308, [#allocation12]
        $region40: #{tpu_custom_call.1} parent=11 // pred_fallthru
          _
      $region12: #{tpu_custom_call.1} parent=5 // pred_fallthru
        _
      %p311 = scmp.lt.s32.totalorder %s23, 2
      // Predicated region
      $region41: #{tpu_custom_call.1} parent=5 // pred_check
        %p312 = pneg %p311
      $region42: #{tpu_custom_call.1} parent=5 // pred_check_branch
        %314 = sbr.rel (%p312) target = $region44
      $region43: #{tpu_custom_call.1} parent=5 // pred_region
        // Predicated region
        $region45: #{tpu_custom_call.1} parent=43 // pred_check
          %p315 = pneg %p43
        $region46: #{tpu_custom_call.1} parent=43 // pred_check_branch
          %317 = sbr.rel (%p315) target = $region48
        $region47: #{tpu_custom_call.1} parent=43 // pred_region
          %s318 = sand.u32 %s33, 1
          %s319 = scalar_lea.sflag [#allocation3], %s318
          %s320 = sand.u32 %s33, 1
          %s321 = smul.addr %s320, 8
          %s322 = scalar_lea.vmem [#allocation2], %s321
          %324 = vsyncadd %s319, 0
          %s325 = smul.addr %s23, 8
          %s326 = scalar_lea.hbm %s0, %s325
          %s328 = sshll.u32 %s326, 4
          %s329 = int_to_ptr.hbm [resolvable:$true] %s328
          %s330 = sshll.u32 %s322, 4
          %s331 = int_to_ptr.vmem [resolvable:$true] %s330
          %333 = dma.hbm_to_vmem [thread:$0]  %s329, 128, %s331, %s319
        $region48: #{tpu_custom_call.1} parent=43 // pred_fallthru
          _
      $region44: #{tpu_custom_call.1} parent=5 // pred_fallthru
        _
      %p334 = scmp.le.s32.totalorder 1, %s23
      %p335 = scmp.lt.s32.totalorder %s23, 3
      %p336 = pnand %p334, %p335
      %p337 = pneg %p336
      // Predicated region
      $region49: #{tpu_custom_call.1} parent=5 // pred_check
        _
      $region50: #{tpu_custom_call.1} parent=5 // pred_check_branch
        %339 = sbr.rel (%p336) target = $region52
      $region51: #{tpu_custom_call.1} parent=5 // pred_region
        %s340 = ssub.s32 %s23, 1
        %s341 = sand.u32 %s36, 1
        %s342 = scalar_lea.sflag [#allocation3], %s341
        %s343 = sand.u32 %s36, 1
        %s344 = smul.addr %s343, 8
        %s345 = scalar_lea.vmem [#allocation2], %s344
        // Predicated region
        $region53: #{tpu_custom_call.1} parent=51 // pred_check
          %p346 = pneg %p49
        $region54: #{tpu_custom_call.1} parent=51 // pred_check_branch
          %348 = sbr.rel (%p346) target = $region56
        $region55: #{tpu_custom_call.1} parent=51 // pred_region
          %350 = dma.done %s342, 128
        $region56: #{tpu_custom_call.1} parent=51 // pred_fallthru
          _
        // Predicated region
        $region57: #{tpu_custom_call.1} parent=51 // pred_check
          %p351 = pneg %p70
        $region58: #{tpu_custom_call.1} parent=51 // pred_check_branch
          %353 = sbr.rel (%p351) target = $region60
        $region59: #{tpu_custom_call.1} parent=51 // pred_region
          %355 = dma.done [#allocation6], 512
        $region60: #{tpu_custom_call.1} parent=51 // pred_fallthru
          _
        // Predicated region
        $region61: #{tpu_custom_call.1} parent=51 // pred_check
          %p356 = pneg %p112
        $region62: #{tpu_custom_call.1} parent=51 // pred_check_branch
          %358 = sbr.rel (%p356) target = $region64
        $region63: #{tpu_custom_call.1} parent=51 // pred_region
          %360 = dma.done [#allocation6], 512
        $region64: #{tpu_custom_call.1} parent=51 // pred_fallthru
          _
        // Predicated region
        $region65: #{tpu_custom_call.1} parent=51 // pred_check
          %p361 = pneg %p154
        $region66: #{tpu_custom_call.1} parent=51 // pred_check_branch
          %363 = sbr.rel (%p361) target = $region68
        $region67: #{tpu_custom_call.1} parent=51 // pred_region
          %365 = dma.done [#allocation9], 512
        $region68: #{tpu_custom_call.1} parent=51 // pred_fallthru
          _
        // Predicated region
        $region69: #{tpu_custom_call.1} parent=51 // pred_check
          %p366 = pneg %p175
        $region70: #{tpu_custom_call.1} parent=51 // pred_check_branch
          %368 = sbr.rel (%p366) target = $region72
        $region71: #{tpu_custom_call.1} parent=51 // pred_region
          %370 = dma.done [#allocation9], 512
        $region72: #{tpu_custom_call.1} parent=51 // pred_fallthru
          _
        // Predicated region
        $region73: #{tpu_custom_call.1} parent=51 // pred_check
          %p371 = pneg %p196
        $region74: #{tpu_custom_call.1} parent=51 // pred_check_branch
          %373 = sbr.rel (%p371) target = $region76
        $region75: #{tpu_custom_call.1} parent=51 // pred_region
          %375 = dma.done [#allocation12], 128
        $region76: #{tpu_custom_call.1} parent=51 // pred_fallthru
          _
        %s376 = sand.u32 %s36, 1
        %s377 = scalar_lea.sflag [#allocation3], %s376
        %s378 = sand.u32 %s36, 1
        %s379 = smul.addr %s378, 8
        %s380 = scalar_lea.vmem [#allocation2], %s379
        %p381 = pneg %p49
        %p382 = pneg %p46
        %p383 = pneg %p70
        %p384 = pneg %p67
        %p385 = pneg %p91
        %p386 = pneg %p88
        %p387 = pneg %p112
        %p388 = pneg %p109
        %p389 = pneg %p133
        %p390 = pneg %p130
        %p391 = pneg %p154
        %p392 = pneg %p151
        %p393 = pneg %p175
        %p394 = pneg %p172
        %p395 = pneg %p196
        %p396 = pneg %p193
        %p397 = pneg %p222
        %p398 = pneg %p219
        %s399 = sand.u32 %s209, 1
        %s400 = scalar_lea.sflag [#allocation4], %s399
        %s401 = sand.u32 %s209, 1
        %s402 = smul.addr %s401, 8
        %s403 = scalar_lea.vmem [#allocation13], %s402
        %v404 = vld [vmem:[%s345] sm:$0xff]
        %v405 = vld [vmem:[#allocation5] sm:$0xff]
        %v406 = vld [vmem:[#allocation5 + $0x8] sm:$0xff]
        %v407 = vld [vmem:[#allocation5 + $0x10] sm:$0xff]
        %v408 = vld [vmem:[#allocation5 + $0x18] sm:$0xff]
        %v409 = vld [vmem:[%s2] sm:$0x1]
        %v411 = vperm.slane %v409, 0
        %vm413 = vcmask 261120
        %v415 = vsel %vm413, %v404, 0
        %417 = vmatpush.msra.mxu0 0.0
        %418 = vmatpush.msra.mxu0 0.0
        %419 = vmatpush.msra.mxu0 0.0
        %420 = vmatpush.msra.mxu0 0.0
        %421 = vmatpush.msra.mxu0 0.0
        %422 = vmatpush.msra.mxu0 0.0
        %423 = vmatpush.msra.mxu0 0.0
        %424 = vmatpush.msra.mxu0 0.0
        %425 = vmatpush.msra.mxu0 0.0
        %426 = vmatpush.msra.mxu0 0.0
        %427 = vmatpush.msra.mxu0 0.0
        %428 = vmatpush.msra.mxu0 0.0
        %429 = vmatpush.msra.mxu0 %v408
        %430 = vmatpush.msra.mxu0 %v407
        %431 = vmatpush.msra.mxu0 %v406
        %432 = vmatpush.msra.mxu0 %v405
        %433 = vmatmul.f32.gmra.mxu0 %v415
        %v434 = vpop.f32.mrf.mxu0
        %v435 = vadd.f32 %v411, %v434
        %436 = vdwg.mxu0
        %v437 = vld [vmem:[#allocation8] sm:$0xff]
        %v438 = vld [vmem:[#allocation8 + $0x8] sm:$0xff]
        %v439 = vld [vmem:[#allocation8 + $0x10] sm:$0xff]
        %v440 = vld [vmem:[#allocation8 + $0x18] sm:$0xff]
        %445 = vrot.lane.b32.xlu0 %v437, 32
        %v446 = vpop.permute.xlu0 %445
        %447 = vrot.lane.b32.xlu0 %v438, 32
        %v448 = vpop.permute.xlu0 %447
        %449 = vrot.lane.b32.xlu0 %v439, 32
        %v450 = vpop.permute.xlu0 %449
        %451 = vrot.lane.b32.xlu0 %v440, 32
        %v452 = vpop.permute.xlu0 %451
        %v457 = vmul.f32 %v435, %v446
        %v458 = vmul.f32 %v435, %v448
        %v459 = vmul.f32 %v435, %v450
        %v460 = vmul.f32 %v435, %v452
        %461 = vrot.lane.b32.xlu0 %v437, 64
        %v462 = vpop.permute.xlu0 %461
        %463 = vrot.lane.b32.xlu0 %v438, 64
        %v464 = vpop.permute.xlu0 %463
        %465 = vrot.lane.b32.xlu0 %v439, 64
        %v466 = vpop.permute.xlu0 %465
        %467 = vrot.lane.b32.xlu0 %v440, 64
        %v468 = vpop.permute.xlu0 %467
        %v473 = vmul.f32 %v435, %v462
        %v474 = vmul.f32 %v435, %v464
        %v475 = vmul.f32 %v435, %v466
        %v476 = vmul.f32 %v435, %v468
        %481 = vrot.lane.b32.xlu0 %v457, 96
        %v482 = vpop.permute.xlu0 %481
        %483 = vrot.lane.b32.xlu0 %v458, 96
        %v484 = vpop.permute.xlu0 %483
        %485 = vrot.lane.b32.xlu0 %v459, 96
        %v486 = vpop.permute.xlu0 %485
        %487 = vrot.lane.b32.xlu0 %v460, 96
        %v488 = vpop.permute.xlu0 %487
        %v490 = vsel %vm413, %v435, 0
        %v492 = vsel %vm413, %v482, 0
        %v494 = vsel %vm413, %v484, 0
        %v496 = vsel %vm413, %v486, 0
        %v498 = vsel %vm413, %v488, 0
        %500 = vmatpush.xpose.msra.mxu0 0.0
        %501 = vmatpush.xpose.msra.mxu0 0.0
        %502 = vmatpush.xpose.msra.mxu0 0.0
        %503 = vmatpush.xpose.msra.mxu0 0.0
        %504 = vmatpush.xpose.msra.mxu0 0.0
        %505 = vmatpush.xpose.msra.mxu0 0.0
        %506 = vmatpush.xpose.msra.mxu0 0.0
        %507 = vmatpush.xpose.msra.mxu0 0.0
        %508 = vmatpush.xpose.msra.mxu0 0.0
        %509 = vmatpush.xpose.msra.mxu0 0.0
        %510 = vmatpush.xpose.msra.mxu0 0.0
        %511 = vmatpush.xpose.msra.mxu0 0.0
        %512 = vmatpush.xpose.msra.mxu0 %v498
        %513 = vmatpush.xpose.msra.mxu0 %v496
        %514 = vmatpush.xpose.msra.mxu0 %v494
        %515 = vmatpush.xpose.msra.mxu0 %v492
        %516 = vmatmul.f32.gmra.mxu0 %v490
        %v517 = vpop.f32.mrf.mxu0
        %v518 = vadd.f32 0.0, %v517
        %519 = vdwg.mxu0
        %v520 = vld [vmem:[#allocation11] sm:$0xff]
        %v521 = vsel %vm413, %v518, -inf
        %522 = vmax.xlane.f32.xlu0 %v521
        %v523 = vpop.xlane.xlu0 %522
        %v524 = vsub.f32 %v518, %v523
        %v525 = vmul.f32 %v524, 1.442695
        %v526 = vpow.pop %v525
        %v527 = vmul.f32 %v526, %v520
        %v528 = vld [vmem:[#allocation10] sm:$0xff]
        %v529 = vld [vmem:[#allocation10 + $0x8] sm:$0xff]
        %v530 = vld [vmem:[#allocation10 + $0x10] sm:$0xff]
        %v531 = vld [vmem:[#allocation10 + $0x18] sm:$0xff]
        %v532 = vsub.f32 1.0, %v520
        %v534 = vsel %vm413, %v527, 0
        %536 = vmatpush.msra.mxu0 0.0
        %537 = vmatpush.msra.mxu0 0.0
        %538 = vmatpush.msra.mxu0 0.0
        %539 = vmatpush.msra.mxu0 0.0
        %540 = vmatpush.msra.mxu0 0.0
        %541 = vmatpush.msra.mxu0 0.0
        %542 = vmatpush.msra.mxu0 0.0
        %543 = vmatpush.msra.mxu0 0.0
        %544 = vmatpush.msra.mxu0 0.0
        %545 = vmatpush.msra.mxu0 0.0
        %546 = vmatpush.msra.mxu0 0.0
        %547 = vmatpush.msra.mxu0 0.0
        %548 = vmatpush.msra.mxu0 %v531
        %549 = vmatpush.msra.mxu0 %v530
        %550 = vmatpush.msra.mxu0 %v529
        %551 = vmatpush.msra.mxu0 %v528
        %552 = vmatmul.f32.gmra.mxu0 %v534
        %v553 = vpop.f32.mrf.mxu0
        %v554 = vadd.f32 %v532, %v553
        %555 = vdwg.mxu0
        %v556 = vrcp.pop %v554
        %v557 = vmul.f32 %v554, %v556
        %v558 = vsub.f32 2.0, %v557
        %v559 = vmul.f32 %v556, %v558
        %v560 = vmul.f32 %v527, %v559
        %565 = vrot.lane.b32.xlu0 %v473, 64
        %v566 = vpop.permute.xlu0 %565
        %567 = vrot.lane.b32.xlu0 %v474, 64
        %v568 = vpop.permute.xlu0 %567
        %569 = vrot.lane.b32.xlu0 %v475, 64
        %v570 = vpop.permute.xlu0 %569
        %571 = vrot.lane.b32.xlu0 %v476, 64
        %v572 = vpop.permute.xlu0 %571
        %v578 = vsel %vm413, %v560, 0
        %580 = vmatpush.msra.mxu0 0.0
        %581 = vmatpush.msra.mxu0 0.0
        %582 = vmatpush.msra.mxu0 0.0
        %583 = vmatpush.msra.mxu0 0.0
        %584 = vmatpush.msra.mxu0 0.0
        %585 = vmatpush.msra.mxu0 0.0
        %586 = vmatpush.msra.mxu0 0.0
        %587 = vmatpush.msra.mxu0 0.0
        %588 = vmatpush.msra.mxu0 0.0
        %589 = vmatpush.msra.mxu0 0.0
        %590 = vmatpush.msra.mxu0 0.0
        %591 = vmatpush.msra.mxu0 0.0
        %592 = vmatpush.msra.mxu0 %v572
        %593 = vmatpush.msra.mxu0 %v570
        %594 = vmatpush.msra.mxu0 %v568
        %595 = vmatpush.msra.mxu0 %v566
        %596 = vmatmul.f32.gmra.mxu0 %v578
        %v597 = vpop.f32.mrf.mxu0
        %v598 = vadd.f32 0.0, %v597
        %599 = vdwg.mxu0
        %v600 = vld [vmem:[#allocation7] sm:$0xff]
        %v601 = vld [vmem:[#allocation7 + $0x8] sm:$0xff]
        %v602 = vld [vmem:[#allocation7 + $0x10] sm:$0xff]
        %v603 = vld [vmem:[#allocation7 + $0x18] sm:$0xff]
        %v604 = vld [vmem:[%s4] sm:$0x1]
        %v606 = vperm.slane %v604, 0
        %v609 = vsel %vm413, %v598, 0
        %611 = vmatpush.msra.mxu0 0.0
        %612 = vmatpush.msra.mxu0 0.0
        %613 = vmatpush.msra.mxu0 0.0
        %614 = vmatpush.msra.mxu0 0.0
        %615 = vmatpush.msra.mxu0 0.0
        %616 = vmatpush.msra.mxu0 0.0
        %617 = vmatpush.msra.mxu0 0.0
        %618 = vmatpush.msra.mxu0 0.0
        %619 = vmatpush.msra.mxu0 0.0
        %620 = vmatpush.msra.mxu0 0.0
        %621 = vmatpush.msra.mxu0 0.0
        %622 = vmatpush.msra.mxu0 0.0
        %623 = vmatpush.msra.mxu0 %v603
        %624 = vmatpush.msra.mxu0 %v602
        %625 = vmatpush.msra.mxu0 %v601
        %626 = vmatpush.msra.mxu0 %v600
        %627 = vmatmul.f32.gmra.mxu0 %v609
        %v628 = vpop.f32.mrf.mxu0
        %v629 = vadd.f32 %v606, %v628
        %630 = vdwg.mxu0
        %631 = vst.msk [vmem:[%s403] sm:$0xff] %vm413, %v629
        %s632 = sand.u32 %s209, 1
        %s633 = scalar_lea.sflag [#allocation4], %s632
        %s634 = sand.u32 %s209, 1
        %s635 = smul.addr %s634, 8
        %s636 = scalar_lea.vmem [#allocation13], %s635
        // Predicated region
        $region77: #{tpu_custom_call.1} parent=51 // pred_check
          %p637 = pneg %p219
        $region78: #{tpu_custom_call.1} parent=51 // pred_check_branch
          %639 = sbr.rel (%p637) target = $region80
        $region79: #{tpu_custom_call.1} parent=51 // pred_region
          %641 = vsyncadd %s633, 0
          %s642 = smul.addr %s28, 8
          %s643 = scalar_lea.hbm %s8, %s642
          %s645 = sshll.u32 %s636, 4
          %s646 = int_to_ptr.vmem [resolvable:$true] %s645
          %s647 = sshll.u32 %s643, 4
          %s648 = int_to_ptr.hbm [resolvable:$true] %s647
          %650 = dma.vmem_to_hbm [thread:$0]  %s646, 128, %s648, %s633
        $region80: #{tpu_custom_call.1} parent=51 // pred_fallthru
          _
      $region52: #{tpu_custom_call.1} parent=5 // pred_fallthru
        _
      %p651 = scmp.le.s32.totalorder 2, %s23
      // Predicated region
      $region81: #{tpu_custom_call.1} parent=5 // pred_check
        %p652 = pneg %p651
      $region82: #{tpu_custom_call.1} parent=5 // pred_check_branch
        %654 = sbr.rel (%p652) target = $region84
      $region83: #{tpu_custom_call.1} parent=5 // pred_region
        %s655 = ssub.s32 %s23, 2
        // Predicated region
        $region85: #{tpu_custom_call.1} parent=83 // pred_check
          %p656 = pneg %p225
        $region86: #{tpu_custom_call.1} parent=83 // pred_check_branch
          %658 = sbr.rel (%p656) target = $region88
        $region87: #{tpu_custom_call.1} parent=83 // pred_region
          %s659 = sand.u32 %s210, 1
          %s660 = scalar_lea.sflag [#allocation4], %s659
          %s661 = sand.u32 %s210, 1
          %s662 = smul.addr %s661, 8
          %s663 = scalar_lea.vmem [#allocation13], %s662
          %665 = dma.done %s660, 128
        $region88: #{tpu_custom_call.1} parent=83 // pred_fallthru
          _
      $region84: #{tpu_custom_call.1} parent=5 // pred_fallthru
        _
    $region6: #{tpu_custom_call.1} parent=1 // loop_footer
      %s27 = sadd.s32 1, %s23
    $region7: #{tpu_custom_call.1} parent=1 // loop_footer_branch
      %22 = sbr.rel target = $region3
    $region8: #{tpu_custom_call.1} parent=1 // loop_exit
      _
    %666 = vsyncpa [#allocation3], 1
    %s667 = scalar_lea.sflag [#allocation3], 1
    %668 = vsyncpa %s667, 1
    %669 = vsyncpa [#allocation6], 1
    %670 = vsyncpa [#allocation9], 1
    %671 = vsyncpa [#allocation12], 1
    %672 = vsyncpa [#allocation4], 1
    %s673 = scalar_lea.sflag [#allocation4], 1
    %674 = vsyncpa %s673, 1

</llo_original>
